<compile_context>
chip_gen: v7x
topology: tpu7x:2x2x1
jax: 0.10.0
libtpu: 0.0.40
codegen_flags: <defaults>
</compile_context>

<pallas_src>
import math

import jax
import jax.numpy as jnp
from jax import lax
from jax.experimental import pallas as pl
from jax.experimental.pallas import tpu as pltpu

P_APPLY = 0.5   # RandomApply probability p
GAIN = 0.5      # deterministic parameter of the wrapped transform

_LANE = 128
_SUBLANE = 8
_TILE_BYTES_BUDGET = 4 << 20      # ~4 MiB/tile -> 4 resident buffers ~16 MiB
_VMEM_LIMIT_BYTES = 32 << 20      # explicit scoped-VMEM request (all gens)
_MAX_LANE_BLOCK = 32 * 1024       # lane-block cap (multiple of 128)
_MIN_GRID_STEPS = 8               # enough steps for pipelining / v7x 2-TC


def gain_kernel(x_ref, o_ref):
    # Pure elementwise transform hot path; the Bernoulli branch was resolved
    # in the wrapper (lax.cond), so there is no per-vreg select here.
    o_ref[...] = (x_ref[...] * GAIN).astype(o_ref.dtype)


def _rdown(x, m):
    return (x // m) * m


def _rup(x, m):
    return -(-x // m) * m


def _pick_row_tile(rows: int, budget_rows: int) -> int:
    """Row tile: multiple of 8 (or the full dim), capped by the byte budget,
    and shrunk if needed so the grid has >= _MIN_GRID_STEPS steps."""
    if rows <= _SUBLANE:
        return rows                                   # full dim is always legal
    rt = max(_SUBLANE, _rdown(min(rows, max(budget_rows, _SUBLANE)), _SUBLANE))
    if rt >= rows:
        return rows
    if -(-rows // rt) < _MIN_GRID_STEPS:
        rt = min(rt, max(_SUBLANE, _rup(-(-rows // _MIN_GRID_STEPS), _SUBLANE)))
    return rt


def _plan(n_elems: int, itemsize: int, fb_rows: int, fb_cols: int):
    """Return (view_rows, view_cols, row_tile, col_tile)."""
    budget_elems = max(_TILE_BYTES_BUDGET // itemsize, _SUBLANE * _LANE)

    # Preferred: flat (N/W, W) view, W a big multiple of 128 that divides N.
    if n_elems % _LANE == 0:
        w_cap = min(_MAX_LANE_BLOCK,
                    max(_LANE, _rdown(budget_elems // _SUBLANE, _LANE)))
        w = next((c for c in range(w_cap, _LANE - 1, -_LANE)
                  if n_elems % c == 0), 0)
        if w:
            rows = n_elems // w
            return rows, w, _pick_row_tile(rows, max(1, budget_elems // w)), w

    # Fallback: original (B*C, T) layout; lane-tile when T is 128-aligned,
    # otherwise the full array dim (always legal) is used.
    rows, cols = fb_rows, fb_cols
    if cols % _LANE == 0 and cols > _LANE:
        ct = max(_LANE, min(_rdown(cols, _LANE),
                            _rdown(budget_elems // _SUBLANE, _LANE)))
    else:
        ct = cols
    rt = _pick_row_tile(rows, max(1, budget_elems // max(ct, 1)))
    return rows, cols, rt, ct


def _apply_gain_pallas(x2d: jax.Array, rt: int, ct: int) -> jax.Array:
    rows, cols = x2d.shape
    grid = (pl.cdiv(rows, rt), pl.cdiv(cols, ct))
    return pl.pallas_call(
        gain_kernel,
        out_shape=jax.ShapeDtypeStruct((rows, cols), x2d.dtype),
        grid_spec=pltpu.PrefetchScalarGridSpec(
            num_scalar_prefetch=0,
            grid=grid,
            in_specs=[pl.BlockSpec((rt, ct), lambda i, j: (i, j))],
            out_specs=pl.BlockSpec((rt, ct), lambda i, j: (i, j)),
        ),
        # Write the transform result in place of the input tile.
        input_output_aliases={0: 0},
        compiler_params=pltpu.CompilerParams(
            dimension_semantics=("parallel", "parallel"),  # megacore sharding
            vmem_limit_bytes=_VMEM_LIMIT_BYTES,
        ),
    )(x2d)


def random_apply(audio: jax.Array, key: jax.Array, p: float = P_APPLY) -> jax.Array:
    """Pallas implementation of RandomApply(transform=gain, p=p)."""
    orig_shape = audio.shape
    t = orig_shape[-1]
    fb_rows = max(1, math.prod(orig_shape[:-1]))
    n = fb_rows * t

    rows, cols, rt, ct = _plan(n, audio.dtype.itemsize, fb_rows, t)
    x2d = audio.reshape(rows, cols)          # contiguous view, zero-cost

    # torch.rand(1) equivalent; PyTorch: `if p < u: identity else: transform`.
    u = jax.random.uniform(key, (), dtype=jnp.float32)
    apply_transform = jnp.float32(p) >= u

    # Identity branch launches no kernel; with donation + aliasing it moves
    # zero HBM bytes.
    out2d = lax.cond(apply_transform,
                     lambda x: _apply_gain_pallas(x, rt, ct),
                     lambda x: x,
                     x2d)
    return out2d.reshape(orig_shape)


if __name__ == "__main__":
    key = jax.random.PRNGKey(0)
    k_data, k_apply = jax.random.split(key)

    # Small audio batch: batch=2, channels=4, time=256 (lane-aligned).
    audio = jax.random.normal(k_data, (2, 4, 256), dtype=jnp.float32)
    in_shape, in_dtype = audio.shape, audio.dtype

    # Reference (pure JAX) for the same Bernoulli decision, computed BEFORE
    # the call because the jitted function donates its input buffer.
    u = jax.random.uniform(k_apply, (), dtype=jnp.float32)
    ref = jnp.where(jnp.float32(P_APPLY) < u, audio, audio * jnp.float32(GAIN))
    ref = jax.block_until_ready(ref)

    fn = jax.jit(random_apply, donate_argnums=(0,))
    out = jax.block_until_ready(fn(audio, k_apply))

    assert out.shape == in_shape and out.dtype == in_dtype
    assert jnp.allclose(out, ref, atol=1e-6), "mismatch vs reference"

    print("KERNEL_OK")
</pallas_src>

<mosaic_0001>
module attributes {stable_mosaic.version = 11 : i64} {
  func.func @gain_kernel(%arg0: i32, %arg1: i32, %arg2: memref<1x2048xf32, #tpu.memory_space<vmem>>, %arg3: memref<1x2048xf32, #tpu.memory_space<vmem>>) attributes {dimension_semantics = [#tpu.dimension_semantics<parallel>, #tpu.dimension_semantics<parallel>], iteration_bounds = array<i64: 1, 1>, scalar_prefetch = 0 : i64, scratch_operands = 0 : i64, tpu.core_type = #tpu.core_type<tc>, window_params = [{transform_indices = @transform_0, window_bounds = array<i64: 1, 2048>}, {transform_indices = @transform_1, window_bounds = array<i64: 1, 2048>}]} {
    %c0 = arith.constant 0 : index
    %c0_0 = arith.constant 0 : index
    %0 = vector.load %arg2[%c0, %c0_0] : memref<1x2048xf32, #tpu.memory_space<vmem>>, vector<1x2048xf32>
    %cst = arith.constant 5.000000e-01 : f32
    %1 = vector.broadcast %cst : f32 to vector<1x2048xf32>
    %2 = arith.mulf %0, %1 : vector<1x2048xf32>
    %c0_1 = arith.constant 0 : index
    %c0_2 = arith.constant 0 : index
    %3 = vector.load %arg3[%c0_1, %c0_2] : memref<1x2048xf32, #tpu.memory_space<vmem>>, vector<1x2048xf32>
    tpu.vector_store %arg3[%c0_1, %c0_2], %2 {strides = array<i32>} : memref<1x2048xf32, #tpu.memory_space<vmem>>, vector<1x2048xf32>,
    return
  }
  func.func @transform_0(%arg0: i32, %arg1: i32) -> (i32, i32) {
    %c0_i32 = arith.constant 0 : i32
    return %arg0, %arg1 : i32, i32
  }
  func.func @transform_1(%arg0: i32, %arg1: i32) -> (i32, i32) {
    %c0_i32 = arith.constant 0 : i32
    return %arg0, %arg1 : i32, i32
  }
}

</mosaic_0001>

<llo_original>
// kernel: branch_1_fun.1
$region0: #{branch_1_fun.1}
  #allocation0 [shape = 'u32[]', space=smem, size = 0x4, offset = 0x4, fixed_abs, tag = 'smem constant byte address 0x4 - core index']
  #allocation1 [shape = 'u32[144,128]{1,0:T(1,128)}', space=vmem, size = 0x12000, scoped, tag = 'internal scratch']
  %s0 = inlined_call_operand.vmem [shape: f32[1,2048], index: 0, kind: input, shape index: {}, may-alias: {0,1}]
  %s1 = inlined_call_operand.vmem [shape: f32[1,2048], index: 1, kind: output, shape index: {}, may-alias: {0,1}]
  %s2 = sld [smem:[#allocation0]]
  $region14: #{branch_1_fun.1} parent=0
    _
  %s4 = ssub.s32 1, %s2
  %s5 = scalar_select 0, %s4, %s2
  // Predicated region
  $region2: #{branch_1_fun.1} parent=0 // pred_check
    _
  $region3: #{branch_1_fun.1} parent=0 // pred_check_branch
    %7 = sbr.rel (0) target = $region5
  $region4: #{branch_1_fun.1} parent=0 // pred_region
    _
  $region5: #{branch_1_fun.1} parent=0 // pred_fallthru
    _
  %v8 = vld [vmem:[%s0] sm:$0xff]
  %v9 = vld [vmem:[%s0 + $0x8] sm:$0xff]
  %v10 = vmul.f32 %v8, 0.5
  %v11 = vmul.f32 %v9, 0.5
  %12 = vst [vmem:[%s1] sm:$0xff] %v10
  %13 = vst [vmem:[%s1 + $0x8] sm:$0xff] %v11
  // Predicated region
  $region6: #{branch_1_fun.1} parent=0 // pred_check
    _
  $region7: #{branch_1_fun.1} parent=0 // pred_check_branch
    %15 = sbr.rel (0) target = $region9
  $region8: #{branch_1_fun.1} parent=0 // pred_region
    _
  $region9: #{branch_1_fun.1} parent=0 // pred_fallthru
    _
  // Predicated region
  $region10: #{branch_1_fun.1} parent=0 // pred_check
    _
  $region11: #{branch_1_fun.1} parent=0 // pred_check_branch
    %17 = sbr.rel (0) target = $region13
  $region12: #{branch_1_fun.1} parent=0 // pred_region
    _
  $region13: #{branch_1_fun.1} parent=0 // pred_fallthru
    _

</llo_original>
